<compile_context>
chip_gen: v5e
topology: v5e:2x2
jax: 0.10.0
libtpu: 0.0.40
codegen_flags: <defaults>
</compile_context>

<pallas_src>
import jax
import jax.numpy as jnp
from jax import lax
from jax.experimental import pallas as pl
from jax.experimental.pallas import tpu as pltpu


def _round_up(x, m):
    return (x + m - 1) // m * m


def _gelu_exact(x):
    # PyTorch nn.GELU() default is the exact (erf) formulation.
    return 0.5 * x * (1.0 + lax.erf(x * (1.0 / jnp.sqrt(2.0))))


def _choose_tm(m, hp, fp, op, in_bytes, vmem_budget=48 * 1024 * 1024):
    """Largest row-tile (multiple of 8) that keeps the working set in VMEM."""
    m8 = _round_up(m, 8)
    for tm in (1024, 512, 256, 128, 64, 32, 16, 8):
        if tm > m8:
            continue
        weights = 2 * (hp * fp + fp * op + fp + op) * in_bytes   # resident panels (2x buf)
        io = 2 * tm * (hp + op) * in_bytes                       # double-buffered x / out
        inter = tm * fp * 4                                      # f32 GELU intermediate
        if weights + io + inter <= vmem_budget:
            return tm
    return 8


def mlp_block_kernel(x_ref, w1_ref, b1_ref, w2_ref, b2_ref, o_ref):
    # x_ref : (TM, Hp)   w1_ref: (Hp, Fp)   b1_ref: (1, Fp)
    # w2_ref: (Fp, Op)   b2_ref: (1, Op)    o_ref : (TM, Op)
    x = x_ref[...]

    # linear1: native-dtype operands on the MXU, f32 accumulation.
    h = jnp.dot(x, w1_ref[...], preferred_element_type=jnp.float32)
    h = h + b1_ref[...].astype(jnp.float32)
    h = _gelu_exact(h)
    # drop1: dropout_rate == 0.0 -> identity.

    # linear2: feed the MXU in the input dtype, keep the f32 accumulator.
    y = jnp.dot(h.astype(x_ref.dtype), w2_ref[...],
                preferred_element_type=jnp.float32)
    y = y + b2_ref[...].astype(jnp.float32)
    # drop2: identity.

    o_ref[...] = y.astype(o_ref.dtype)


def mlp_block(x, w1, b1, w2, b2):
    """x: (..., H); w1: (H, F); b1: (F,); w2: (F, O); b2: (O,)."""
    orig_shape = x.shape
    H = orig_shape[-1]
    F = w1.shape[1]
    O = w2.shape[1]
    M = 1
    for d in orig_shape[:-1]:
        M *= int(d)
    x2d = x.reshape(M, H)

    # Lane-dense padding of the feature dims (multiples of 128).
    Hp = _round_up(H, 128)
    Fp = _round_up(F, 128)
    Op = _round_up(O, 128)

    in_bytes = jnp.dtype(x.dtype).itemsize
    TM = _choose_tm(M, Hp, Fp, Op, in_bytes)
    Mp = _round_up(max(M, TM), TM)

    xp = jnp.pad(x2d, ((0, Mp - M), (0, Hp - H)))
    w1p = jnp.pad(w1, ((0, Hp - H), (0, Fp - F)))
    b1p = jnp.pad(b1, (0, Fp - F)).reshape(1, Fp)
    w2p = jnp.pad(w2, ((0, Fp - F), (0, Op - O)))
    b2p = jnp.pad(b2, (0, Op - O)).reshape(1, Op)

    cost = pl.CostEstimate(
        flops=2 * M * (H * F + F * O),
        transcendentals=M * F,
        bytes_accessed=(M * H + H * F + F + F * O + O + M * O) * in_bytes,
    )

    out2d = pl.pallas_call(
        mlp_block_kernel,
        out_shape=jax.ShapeDtypeStruct((Mp, Op), x.dtype),
        grid_spec=pltpu.PrefetchScalarGridSpec(
            num_scalar_prefetch=0,
            grid=(Mp // TM,),
            in_specs=[
                pl.BlockSpec((TM, Hp), lambda i: (i, 0)),   # x tile: pipelined over M
                pl.BlockSpec((Hp, Fp), lambda i: (0, 0)),   # w1: VMEM-resident
                pl.BlockSpec((1, Fp), lambda i: (0, 0)),    # b1
                pl.BlockSpec((Fp, Op), lambda i: (0, 0)),   # w2: VMEM-resident
                pl.BlockSpec((1, Op), lambda i: (0, 0)),    # b2
            ],
            out_specs=pl.BlockSpec((TM, Op), lambda i: (i, 0)),
        ),
        compiler_params=pltpu.CompilerParams(
            dimension_semantics=("parallel",),
            vmem_limit_bytes=64 * 1024 * 1024,
        ),
        cost_estimate=cost,
    )(xp, w1p, b1p, w2p, b2p)

    return out2d[:M, :O].reshape(*orig_shape[:-1], O)


if __name__ == "__main__":
    # Shapes mimic the HRTransStage1 'fc' fusion: after concatenating two
    # feature streams of C=24 channels, MLPBlock(hidden_size=48, mlp_dim=24,
    # output_dim=24, dropout_rate=0.0) is applied to a (b, d, h, w, c) tensor.
    B, D, Hs, Ws = 2, 4, 4, 4
    embed_dim = 24
    hidden_size = 2 * embed_dim     # 48 (channel concat)
    mlp_dim = hidden_size // 2      # 24
    output_dim = embed_dim          # 24

    key = jax.random.PRNGKey(0)
    kx, k1, k2, k3, k4 = jax.random.split(key, 5)

    x = jax.random.normal(kx, (B, D, Hs, Ws, hidden_size), dtype=jnp.float32)

    # Deterministic parameter init (roughly matching nn.Linear's uniform init).
    lim1 = 1.0 / jnp.sqrt(hidden_size)
    lim2 = 1.0 / jnp.sqrt(mlp_dim)
    w1 = jax.random.uniform(k1, (hidden_size, mlp_dim), jnp.float32, -lim1, lim1)
    b1 = jax.random.uniform(k2, (mlp_dim,), jnp.float32, -lim1, lim1)
    w2 = jax.random.uniform(k3, (mlp_dim, output_dim), jnp.float32, -lim2, lim2)
    b2 = jax.random.uniform(k4, (output_dim,), jnp.float32, -lim2, lim2)

    out = mlp_block(x, w1, b1, w2, b2)
    jax.block_until_ready(out)

    # Pure-JAX reference check (exact-erf GELU, dropout=identity).
    ref = jnp.einsum("...h,hf->...f", x, w1) + b1
    ref = 0.5 * ref * (1.0 + lax.erf(ref / jnp.sqrt(2.0)))
    ref = jnp.einsum("...f,fo->...o", ref, w2) + b2
    assert jnp.allclose(out, ref, atol=1e-5, rtol=1e-5)

    print("KERNEL_OK")
</pallas_src>

<mosaic_0001>
module attributes {stable_mosaic.version = 11 : i64} {
  func.func @mlp_block_kernel(%arg0: i32, %arg1: memref<128x128xf32, #tpu.memory_space<vmem>>, %arg2: memref<128x128xf32, #tpu.memory_space<vmem>>, %arg3: memref<1x128xf32, #tpu.memory_space<vmem>>, %arg4: memref<128x128xf32, #tpu.memory_space<vmem>>, %arg5: memref<1x128xf32, #tpu.memory_space<vmem>>, %arg6: memref<128x128xf32, #tpu.memory_space<vmem>>) attributes {dimension_semantics = [#tpu.dimension_semantics<parallel>], iteration_bounds = array<i64: 1>, scalar_prefetch = 0 : i64, scratch_operands = 0 : i64, tpu.core_type = #tpu.core_type<tc>, window_params = [{transform_indices = @transform_0, window_bounds = array<i64: 128, 128>}, {pipeline_mode = #tpu.pipeline_mode<synchronous>, transform_indices = @transform_1, window_bounds = array<i64: 128, 128>}, {pipeline_mode = #tpu.pipeline_mode<synchronous>, transform_indices = @transform_2, window_bounds = array<i64: 1, 128>}, {pipeline_mode = #tpu.pipeline_mode<synchronous>, transform_indices = @transform_3, window_bounds = array<i64: 128, 128>}, {pipeline_mode = #tpu.pipeline_mode<synchronous>, transform_indices = @transform_4, window_bounds = array<i64: 1, 128>}, {transform_indices = @transform_5, window_bounds = array<i64: 128, 128>}]} {
    %c0 = arith.constant 0 : index
    %c0_0 = arith.constant 0 : index
    %0 = vector.load %arg1[%c0, %c0_0] : memref<128x128xf32, #tpu.memory_space<vmem>>, vector<128x128xf32>
    %c0_1 = arith.constant 0 : index
    %c0_2 = arith.constant 0 : index
    %1 = vector.load %arg2[%c0_1, %c0_2] : memref<128x128xf32, #tpu.memory_space<vmem>>, vector<128x128xf32>
    %cst = arith.constant dense<0.000000e+00> : vector<128x128xf32>
    %2 = tpu.matmul %0, %1, %cst {dimension_numbers = #tpu.dot_dimension_numbers<[1], [0], [0], [1], [0, 0, 1, 1], [], []>} : vector<128x128xf32>, vector<128x128xf32>, vector<128x128xf32> -> vector<128x128xf32>
    %c0_3 = arith.constant 0 : index
    %c0_4 = arith.constant 0 : index
    %3 = vector.load %arg3[%c0_3, %c0_4] : memref<1x128xf32, #tpu.memory_space<vmem>>, vector<1x128xf32>
    %4 = vector.broadcast %3 : vector<1x128xf32> to vector<128x128xf32>
    %5 = arith.addf %2, %4 : vector<128x128xf32>
    %cst_5 = arith.constant 5.000000e-01 : f32
    %6 = vector.broadcast %cst_5 : f32 to vector<128x128xf32>
    %7 = arith.mulf %6, %5 : vector<128x128xf32>
    %cst_6 = arith.constant 2.000000e+00 : f32
    %8 = math.sqrt %cst_6 : f32
    %cst_7 = arith.constant 1.000000e+00 : f32
    %9 = arith.divf %cst_7, %8 : f32
    %10 = vector.broadcast %9 : f32 to vector<128x128xf32>
    %11 = arith.mulf %5, %10 : vector<128x128xf32>
    %12 = math.erf %11 : vector<128x128xf32>
    %cst_8 = arith.constant 1.000000e+00 : f32
    %13 = vector.broadcast %cst_8 : f32 to vector<128x128xf32>
    %14 = arith.addf %13, %12 : vector<128x128xf32>
    %15 = arith.mulf %7, %14 : vector<128x128xf32>
    %c0_9 = arith.constant 0 : index
    %c0_10 = arith.constant 0 : index
    %16 = vector.load %arg4[%c0_9, %c0_10] : memref<128x128xf32, #tpu.memory_space<vmem>>, vector<128x128xf32>
    %cst_11 = arith.constant dense<0.000000e+00> : vector<128x128xf32>
    %17 = tpu.matmul %15, %16, %cst_11 {dimension_numbers = #tpu.dot_dimension_numbers<[1], [0], [0], [1], [0, 0, 1, 1], [], []>} : vector<128x128xf32>, vector<128x128xf32>, vector<128x128xf32> -> vector<128x128xf32>
    %c0_12 = arith.constant 0 : index
    %c0_13 = arith.constant 0 : index
    %18 = vector.load %arg5[%c0_12, %c0_13] : memref<1x128xf32, #tpu.memory_space<vmem>>, vector<1x128xf32>
    %19 = vector.broadcast %18 : vector<1x128xf32> to vector<128x128xf32>
    %20 = arith.addf %17, %19 : vector<128x128xf32>
    %c0_14 = arith.constant 0 : index
    %c0_15 = arith.constant 0 : index
    %21 = vector.load %arg6[%c0_14, %c0_15] : memref<128x128xf32, #tpu.memory_space<vmem>>, vector<128x128xf32>
    tpu.vector_store %arg6[%c0_14, %c0_15], %20 {strides = array<i32>} : memref<128x128xf32, #tpu.memory_space<vmem>>, vector<128x128xf32>,
    return
  }
  func.func @transform_0(%arg0: i32) -> (i32, i32) {
    %c0_i32 = arith.constant 0 : i32
    %c0_i32_0 = arith.constant 0 : i32
    return %arg0, %c0_i32 : i32, i32
  }
  func.func @transform_1(%arg0: i32) -> (i32, i32) {
    %c0_i32 = arith.constant 0 : i32
    %c0_i32_0 = arith.constant 0 : i32
    %c0_i32_1 = arith.constant 0 : i32
    return %c0_i32, %c0_i32_0 : i32, i32
  }
  func.func @transform_2(%arg0: i32) -> (i32, i32) {
    %c0_i32 = arith.constant 0 : i32
    %c0_i32_0 = arith.constant 0 : i32
    %c0_i32_1 = arith.constant 0 : i32
    return %c0_i32, %c0_i32_0 : i32, i32
  }
  func.func @transform_3(%arg0: i32) -> (i32, i32) {
    %c0_i32 = arith.constant 0 : i32
    %c0_i32_0 = arith.constant 0 : i32
    %c0_i32_1 = arith.constant 0 : i32
    return %c0_i32, %c0_i32_0 : i32, i32
  }
  func.func @transform_4(%arg0: i32) -> (i32, i32) {
    %c0_i32 = arith.constant 0 : i32
    %c0_i32_0 = arith.constant 0 : i32
    %c0_i32_1 = arith.constant 0 : i32
    return %c0_i32, %c0_i32_0 : i32, i32
  }
  func.func @transform_5(%arg0: i32) -> (i32, i32) {
    %c0_i32 = arith.constant 0 : i32
    %c0_i32_0 = arith.constant 0 : i32
    return %arg0, %c0_i32 : i32, i32
  }
}

</mosaic_0001>

<llo_original>
// kernel: tpu_custom_call.1
$region0: #{tpu_custom_call.1}
  #allocation0 [shape = 'u32[]', space=smem, size = 0x4, offset = 0x4, fixed_abs, tag = 'smem constant byte address 0x4 - core index']
  #allocation1 [shape = 'u32[72,128]{1,0:T(1,128)}', space=vmem, size = 0x9000, scoped, tag = 'internal scratch']
  %s0 = inlined_call_operand.hbm [shape: f32[128,128], index: 0, kind: input, shape index: {}]
  %s1 = inlined_call_operand.hbm [shape: f32[128,128], index: 1, kind: input, shape index: {}]
  %s2 = inlined_call_operand.vmem [shape: f32[1,128], index: 2, kind: input, shape index: {}]
  %s3 = inlined_call_operand.hbm [shape: f32[128,128], index: 3, kind: input, shape index: {}]
  %s4 = inlined_call_operand.vmem [shape: f32[1,128], index: 4, kind: input, shape index: {}]
  %s5 = inlined_call_operand.hbm [shape: f32[128,128], index: 5, kind: output, shape index: {}]
  %s6 = sld [smem:[#allocation0]]
  $region42: #{tpu_custom_call.1} parent=0
    _
  %s8 = ssub.s32 1, %s6
  %s9 = scalar_select 0, %s8, %s6
  $region1: #{tpu_custom_call.1} parent=0
    #allocation2 [shape = 'u8[65536]{0}', space=vmem, size = 0x10000, scoped, tag = 'input window, operand 0, single buffered']
    #allocation3 [shape = 's32[1]{0}', space=sflag, size = 0x4, scoped, tag = 'scoped memory for tpu_custom_call.1']
    #allocation4 [shape = 's32[1]{0}', space=sflag, size = 0x4, scoped, tag = 'scoped memory for tpu_custom_call.1']
    #allocation5 [shape = 'u8[65536]{0}', space=vmem, size = 0x10000, scoped, tag = 'input window, operand 1, single buffered']
    #allocation6 [shape = 's32[1]{0}', space=sflag, size = 0x4, scoped, tag = 'scoped memory for tpu_custom_call.1']
    #allocation7 [shape = 'u8[65536]{0}', space=vmem, size = 0x10000, scoped, tag = 'input window, operand 3, single buffered']
    #allocation8 [shape = 'u8[65536]{0}', space=vmem, size = 0x10000, scoped, tag = 'output window, operand 0, single buffered']
    %10 = vsyncpa [#allocation3], 0
    %11 = vsyncpa [#allocation6], 0
    %12 = vsyncpa [#allocation4], 0
    // Predicated region
    $region2: #{tpu_custom_call.1} parent=1 // pred_check
      _
    $region3: #{tpu_custom_call.1} parent=1 // pred_check_branch
      %14 = sbr.rel (0) target = $region5
    $region4: #{tpu_custom_call.1} parent=1 // pred_region
      %16 = vsyncadd [#allocation3], 0
      %s17 = sshll.u32 %s0, 4
      %s18 = int_to_ptr.hbm [resolvable:$true] %s17
      %s19 = sshll.u32 [#allocation2], 4
      %s20 = int_to_ptr.vmem [resolvable:$true] %s19
      %25 = dma.hbm_to_vmem [thread:$0]  %s18, 2048, %s20, [#allocation3], 128, 128, 8
    $region5: #{tpu_custom_call.1} parent=1 // pred_fallthru
      _
    // Predicated region
    $region6: #{tpu_custom_call.1} parent=1 // pred_check
      _
    $region7: #{tpu_custom_call.1} parent=1 // pred_check_branch
      %27 = sbr.rel (0) target = $region9
    $region8: #{tpu_custom_call.1} parent=1 // pred_region
      %29 = vsyncadd [#allocation6], 0
      %s30 = sshll.u32 %s1, 4
      %s31 = int_to_ptr.hbm [resolvable:$true] %s30
      %s32 = sshll.u32 [#allocation5], 4
      %s33 = int_to_ptr.vmem [resolvable:$true] %s32
      %38 = dma.hbm_to_vmem [thread:$0]  %s31, 2048, %s33, [#allocation6], 128, 128, 8
    $region9: #{tpu_custom_call.1} parent=1 // pred_fallthru
      _
    // Predicated region
    $region10: #{tpu_custom_call.1} parent=1 // pred_check
      _
    $region11: #{tpu_custom_call.1} parent=1 // pred_check_branch
      %40 = sbr.rel (0) target = $region13
    $region12: #{tpu_custom_call.1} parent=1 // pred_region
      _
    $region13: #{tpu_custom_call.1} parent=1 // pred_fallthru
      _
    // Predicated region
    $region14: #{tpu_custom_call.1} parent=1 // pred_check
      _
    $region15: #{tpu_custom_call.1} parent=1 // pred_check_branch
      %42 = sbr.rel (0) target = $region17
    $region16: #{tpu_custom_call.1} parent=1 // pred_region
      %44 = vsyncadd [#allocation6], 0
      %s45 = sshll.u32 %s3, 4
      %s46 = int_to_ptr.hbm [resolvable:$true] %s45
      %s47 = sshll.u32 [#allocation7], 4
      %s48 = int_to_ptr.vmem [resolvable:$true] %s47
      %53 = dma.hbm_to_vmem [thread:$0]  %s46, 2048, %s48, [#allocation6], 128, 128, 8
    $region17: #{tpu_custom_call.1} parent=1 // pred_fallthru
      _
    // Predicated region
    $region18: #{tpu_custom_call.1} parent=1 // pred_check
      _
    $region19: #{tpu_custom_call.1} parent=1 // pred_check_branch
      %55 = sbr.rel (0) target = $region21
    $region20: #{tpu_custom_call.1} parent=1 // pred_region
      _
    $region21: #{tpu_custom_call.1} parent=1 // pred_fallthru
      _
    // Predicated region
    $region22: #{tpu_custom_call.1} parent=1 // pred_check
      _
    $region23: #{tpu_custom_call.1} parent=1 // pred_check_branch
      %57 = sbr.rel (0) target = $region25
    $region24: #{tpu_custom_call.1} parent=1 // pred_region
      %59 = dma.done [#allocation3], 2048
    $region25: #{tpu_custom_call.1} parent=1 // pred_fallthru
      _
    // Predicated region
    $region26: #{tpu_custom_call.1} parent=1 // pred_check
      _
    $region27: #{tpu_custom_call.1} parent=1 // pred_check_branch
      %61 = sbr.rel (0) target = $region29
    $region28: #{tpu_custom_call.1} parent=1 // pred_region
      %63 = dma.done [#allocation6], 2048
    $region29: #{tpu_custom_call.1} parent=1 // pred_fallthru
      _
    // Predicated region
    $region30: #{tpu_custom_call.1} parent=1 // pred_check
      _
    $region31: #{tpu_custom_call.1} parent=1 // pred_check_branch
      %65 = sbr.rel (0) target = $region33
    $region32: #{tpu_custom_call.1} parent=1 // pred_region
      %67 = dma.done [#allocation6], 2048
    $region33: #{tpu_custom_call.1} parent=1 // pred_fallthru
      _
    %v68 = vld [vmem:[#allocation2] sm:$0xff]
    %v69 = vld [vmem:[#allocation2 + $0x8] sm:$0xff]
    %v70 = vld [vmem:[#allocation2 + $0x10] sm:$0xff]
    %v71 = vld [vmem:[#allocation2 + $0x18] sm:$0xff]
    %v72 = vld [vmem:[#allocation2 + $0x20] sm:$0xff]
    %v73 = vld [vmem:[#allocation2 + $0x28] sm:$0xff]
    %v74 = vld [vmem:[#allocation2 + $0x30] sm:$0xff]
    %v75 = vld [vmem:[#allocation2 + $0x38] sm:$0xff]
    %v76 = vld [vmem:[#allocation2 + $0x40] sm:$0xff]
    %v77 = vld [vmem:[#allocation2 + $0x48] sm:$0xff]
    %v78 = vld [vmem:[#allocation2 + $0x50] sm:$0xff]
    %v79 = vld [vmem:[#allocation2 + $0x58] sm:$0xff]
    %v80 = vld [vmem:[#allocation2 + $0x60] sm:$0xff]
    %v81 = vld [vmem:[#allocation2 + $0x68] sm:$0xff]
    %v82 = vld [vmem:[#allocation2 + $0x70] sm:$0xff]
    %v83 = vld [vmem:[#allocation2 + $0x78] sm:$0xff]
    %v84 = vld [vmem:[#allocation5] sm:$0xff]
    %v85 = vld [vmem:[#allocation5 + $0x8] sm:$0xff]
    %v86 = vld [vmem:[#allocation5 + $0x10] sm:$0xff]
    %v87 = vld [vmem:[#allocation5 + $0x18] sm:$0xff]
    %v88 = vld [vmem:[#allocation5 + $0x20] sm:$0xff]
    %v89 = vld [vmem:[#allocation5 + $0x28] sm:$0xff]
    %v90 = vld [vmem:[#allocation5 + $0x30] sm:$0xff]
    %v91 = vld [vmem:[#allocation5 + $0x38] sm:$0xff]
    %v92 = vld [vmem:[#allocation5 + $0x40] sm:$0xff]
    %v93 = vld [vmem:[#allocation5 + $0x48] sm:$0xff]
    %v94 = vld [vmem:[#allocation5 + $0x50] sm:$0xff]
    %v95 = vld [vmem:[#allocation5 + $0x58] sm:$0xff]
    %v96 = vld [vmem:[#allocation5 + $0x60] sm:$0xff]
    %v97 = vld [vmem:[#allocation5 + $0x68] sm:$0xff]
    %v98 = vld [vmem:[#allocation5 + $0x70] sm:$0xff]
    %v99 = vld [vmem:[#allocation5 + $0x78] sm:$0xff]
    %v100 = vld [vmem:[%s2] sm:$0x1]
    %v102 = vperm.slane %v100, 0
    %104 = vmatpush.msra.mxu0 %v99
    %105 = vmatpush.msra.mxu0 %v98
    %106 = vmatpush.msra.mxu0 %v97
    %107 = vmatpush.msra.mxu0 %v96
    %108 = vmatpush.msra.mxu0 %v95
    %109 = vmatpush.msra.mxu0 %v94
    %110 = vmatpush.msra.mxu0 %v93
    %111 = vmatpush.msra.mxu0 %v92
    %112 = vmatpush.msra.mxu0 %v91
    %113 = vmatpush.msra.mxu0 %v90
    %114 = vmatpush.msra.mxu0 %v89
    %115 = vmatpush.msra.mxu0 %v88
    %116 = vmatpush.msra.mxu0 %v87
    %117 = vmatpush.msra.mxu0 %v86
    %118 = vmatpush.msra.mxu0 %v85
    %119 = vmatpush.msra.mxu0 %v84
    %120 = vmatmul.f32.gmra.mxu0 %v68
    %v121 = vpop.f32.mrf.mxu0
    %v122 = vadd.f32 %v102, %v121
    %123 = vmatmul.f32.gmra.mxu0 %v69
    %v124 = vpop.f32.mrf.mxu0
    %v125 = vadd.f32 %v102, %v124
    %126 = vmatmul.f32.gmra.mxu0 %v70
    %v127 = vpop.f32.mrf.mxu0
    %v128 = vadd.f32 %v102, %v127
    %129 = vmatmul.f32.gmra.mxu0 %v71
    %v130 = vpop.f32.mrf.mxu0
    %v131 = vadd.f32 %v102, %v130
    %132 = vmatmul.f32.gmra.mxu0 %v72
    %v133 = vpop.f32.mrf.mxu0
    %v134 = vadd.f32 %v102, %v133
    %135 = vmatmul.f32.gmra.mxu0 %v73
    %v136 = vpop.f32.mrf.mxu0
    %v137 = vadd.f32 %v102, %v136
    %138 = vmatmul.f32.gmra.mxu0 %v74
    %v139 = vpop.f32.mrf.mxu0
    %v140 = vadd.f32 %v102, %v139
    %141 = vmatmul.f32.gmra.mxu0 %v75
    %v142 = vpop.f32.mrf.mxu0
    %v143 = vadd.f32 %v102, %v142
    %144 = vmatmul.f32.gmra.mxu0 %v76
    %v145 = vpop.f32.mrf.mxu0
    %v146 = vadd.f32 %v102, %v145
    %147 = vmatmul.f32.gmra.mxu0 %v77
    %v148 = vpop.f32.mrf.mxu0
    %v149 = vadd.f32 %v102, %v148
    %150 = vmatmul.f32.gmra.mxu0 %v78
    %v151 = vpop.f32.mrf.mxu0
    %v152 = vadd.f32 %v102, %v151
    %153 = vmatmul.f32.gmra.mxu0 %v79
    %v154 = vpop.f32.mrf.mxu0
    %v155 = vadd.f32 %v102, %v154
    %156 = vmatmul.f32.gmra.mxu0 %v80
    %v157 = vpop.f32.mrf.mxu0
    %v158 = vadd.f32 %v102, %v157
    %159 = vmatmul.f32.gmra.mxu0 %v81
    %v160 = vpop.f32.mrf.mxu0
    %v161 = vadd.f32 %v102, %v160
    %162 = vmatmul.f32.gmra.mxu0 %v82
    %v163 = vpop.f32.mrf.mxu0
    %v164 = vadd.f32 %v102, %v163
    %165 = vmatmul.f32.gmra.mxu0 %v83
    %v166 = vpop.f32.mrf.mxu0
    %v167 = vadd.f32 %v102, %v166
    %168 = vdwg.mxu0
    %v169 = vmul.f32 %v122, 0.5
    %v170 = vmul.f32 %v125, 0.5
    %v171 = vmul.f32 %v128, 0.5
    %v172 = vmul.f32 %v131, 0.5
    %v173 = vmul.f32 %v134, 0.5
    %v174 = vmul.f32 %v137, 0.5
    %v175 = vmul.f32 %v140, 0.5
    %v176 = vmul.f32 %v143, 0.5
    %v177 = vmul.f32 %v146, 0.5
    %v178 = vmul.f32 %v149, 0.5
    %v179 = vmul.f32 %v152, 0.5
    %v180 = vmul.f32 %v155, 0.5
    %v181 = vmul.f32 %v158, 0.5
    %v182 = vmul.f32 %v161, 0.5
    %v183 = vmul.f32 %v164, 0.5
    %v184 = vmul.f32 %v167, 0.5
    %v185 = vmul.f32 %v122, 0.70710677
    %v186 = vmul.f32 %v125, 0.70710677
    %v187 = vmul.f32 %v128, 0.70710677
    %v188 = vmul.f32 %v131, 0.70710677
    %v189 = vmul.f32 %v134, 0.70710677
    %v190 = vmul.f32 %v137, 0.70710677
    %v191 = vmul.f32 %v140, 0.70710677
    %v192 = vmul.f32 %v143, 0.70710677
    %v193 = vmul.f32 %v146, 0.70710677
    %v194 = vmul.f32 %v149, 0.70710677
    %v195 = vmul.f32 %v152, 0.70710677
    %v196 = vmul.f32 %v155, 0.70710677
    %v197 = vmul.f32 %v158, 0.70710677
    %v198 = vmul.f32 %v161, 0.70710677
    %v199 = vmul.f32 %v164, 0.70710677
    %v200 = vmul.f32 %v167, 0.70710677
    %v201 = vmul.f32 %v185, %v185
    %v202 = vmin.f32 16.0, %v201
    %v203 = vmul.f32 %v202, 2.1237322e-06
    %v204 = vadd.f32 %v203, 0.00028619796
    %v205 = vmul.f32 %v202, %v204
    %v206 = vadd.f32 %v205, 0.0036580483
    %v207 = vmul.f32 %v202, %v206
    %v208 = vadd.f32 %v207, 0.05243302
    %v209 = vmul.f32 %v202, %v208
    %v210 = vadd.f32 %v209, 0.18741608
    %v211 = vmul.f32 %v202, %v210
    %v212 = vadd.f32 %v211, 1.1283791
    %v213 = vmul.f32 %v185, %v212
    %v214 = vmul.f32 %v202, 3.8918573e-05
    %v215 = vadd.f32 %v214, 0.001143296
    %v216 = vmul.f32 %v202, %v215
    %v217 = vadd.f32 %v216, 0.014752088
    %v218 = vmul.f32 %v202, %v217
    %v219 = vadd.f32 %v218, 0.112945676
    %v220 = vmul.f32 %v202, %v219
    %v221 = vadd.f32 %v220, 0.4994258
    %v222 = vmul.f32 %v202, %v221
    %v223 = vadd.f32 %v222, 1.0
    %v224 = vrcp.pop %v223
    %v225 = vmul.f32 %v223, %v224
    %v226 = vsub.f32 1.0, %v225
    %v227 = vmul.f32 %v224, %v226
    %v228 = vadd.f32 %v224, %v227
    %vm229 = vweird.f32 %v223
    %vm230 = vweird.f32 %v224
    %vm231 = vmor %vm229, %vm230
    %v232 = vsel %vm231, %v224, %v228
    %v233 = vand.u32 2147483647, %v223
    %vm234 = vcmp.eq.f32.partialorder %v233, 8.507059e+37
    %v235 = vand.u32 %v223, 2147483648
    %v236 = vor.u32 1.1754944e-38, %v235
    %v237 = vsel %vm234, %v236, %v232
    %v238 = vmul.f32 %v213, %v237
    %v239 = vmin.f32 %v238, 1.0
    %v240 = vmax.f32 %v239, -1.0
    %v241 = vmul.f32 %v186, %v186
    %v242 = vmin.f32 16.0, %v241
    %v243 = vmul.f32 %v242, 2.1237322e-06
    %v244 = vadd.f32 %v243, 0.00028619796
    %v245 = vmul.f32 %v242, %v244
    %v246 = vadd.f32 %v245, 0.0036580483
    %v247 = vmul.f32 %v242, %v246
    %v248 = vadd.f32 %v247, 0.05243302
    %v249 = vmul.f32 %v242, %v248
    %v250 = vadd.f32 %v249, 0.18741608
    %v251 = vmul.f32 %v242, %v250
    %v252 = vadd.f32 %v251, 1.1283791
    %v253 = vmul.f32 %v186, %v252
    %v254 = vmul.f32 %v242, 3.8918573e-05
    %v255 = vadd.f32 %v254, 0.001143296
    %v256 = vmul.f32 %v242, %v255
    %v257 = vadd.f32 %v256, 0.014752088
    %v258 = vmul.f32 %v242, %v257
    %v259 = vadd.f32 %v258, 0.112945676
    %v260 = vmul.f32 %v242, %v259
    %v261 = vadd.f32 %v260, 0.4994258
    %v262 = vmul.f32 %v242, %v261
    %v263 = vadd.f32 %v262, 1.0
    %v264 = vrcp.pop %v263
    %v265 = vmul.f32 %v263, %v264
    %v266 = vsub.f32 1.0, %v265
    %v267 = vmul.f32 %v264, %v266
    %v268 = vadd.f32 %v264, %v267
    %vm269 = vweird.f32 %v263
    %vm270 = vweird.f32 %v264
    %vm271 = vmor %vm269, %vm270
    %v272 = vsel %vm271, %v264, %v268
    %v273 = vand.u32 2147483647, %v263
    %vm274 = vcmp.eq.f32.partialorder %v273, 8.507059e+37
    %v275 = vand.u32 %v263, 2147483648
    %v276 = vor.u32 1.1754944e-38, %v275
    %v277 = vsel %vm274, %v276, %v272
    %v278 = vmul.f32 %v253, %v277
    %v279 = vmin.f32 %v278, 1.0
    %v280 = vmax.f32 %v279, -1.0
    %v281 = vmul.f32 %v187, %v187
    %v282 = vmin.f32 16.0, %v281
    %v283 = vmul.f32 %v282, 2.1237322e-06
    %v284 = vadd.f32 %v283, 0.00028619796
    %v285 = vmul.f32 %v282, %v284
    %v286 = vadd.f32 %v285, 0.0036580483
    %v287 = vmul.f32 %v282, %v286
    %v288 = vadd.f32 %v287, 0.05243302
    %v289 = vmul.f32 %v282, %v288
    %v290 = vadd.f32 %v289, 0.18741608
    %v291 = vmul.f32 %v282, %v290
    %v292 = vadd.f32 %v291, 1.1283791
    %v293 = vmul.f32 %v187, %v292
    %v294 = vmul.f32 %v282, 3.8918573e-05
    %v295 = vadd.f32 %v294, 0.001143296
    %v296 = vmul.f32 %v282, %v295
    %v297 = vadd.f32 %v296, 0.014752088
    %v298 = vmul.f32 %v282, %v297
    %v299 = vadd.f32 %v298, 0.112945676
    %v300 = vmul.f32 %v282, %v299
    %v301 = vadd.f32 %v300, 0.4994258
    %v302 = vmul.f32 %v282, %v301
    %v303 = vadd.f32 %v302, 1.0
    %v304 = vrcp.pop %v303
    %v305 = vmul.f32 %v303, %v304
    %v306 = vsub.f32 1.0, %v305
    %v307 = vmul.f32 %v304, %v306
    %v308 = vadd.f32 %v304, %v307
    %vm309 = vweird.f32 %v303
    %vm310 = vweird.f32 %v304
    %vm311 = vmor %vm309, %vm310
    %v312 = vsel %vm311, %v304, %v308
    %v313 = vand.u32 2147483647, %v303
    %vm314 = vcmp.eq.f32.partialorder %v313, 8.507059e+37
    %v315 = vand.u32 %v303, 2147483648
    %v316 = vor.u32 1.1754944e-38, %v315
    %v317 = vsel %vm314, %v316, %v312
    %v318 = vmul.f32 %v293, %v317
    %v319 = vmin.f32 %v318, 1.0
    %v320 = vmax.f32 %v319, -1.0
    %v321 = vmul.f32 %v188, %v188
    %v322 = vmin.f32 16.0, %v321
    %v323 = vmul.f32 %v322, 2.1237322e-06
    %v324 = vadd.f32 %v323, 0.00028619796
    %v325 = vmul.f32 %v322, %v324
    %v326 = vadd.f32 %v325, 0.0036580483
    %v327 = vmul.f32 %v322, %v326
    %v328 = vadd.f32 %v327, 0.05243302
    %v329 = vmul.f32 %v322, %v328
    %v330 = vadd.f32 %v329, 0.18741608
    %v331 = vmul.f32 %v322, %v330
    %v332 = vadd.f32 %v331, 1.1283791
    %v333 = vmul.f32 %v188, %v332
    %v334 = vmul.f32 %v322, 3.8918573e-05
    %v335 = vadd.f32 %v334, 0.001143296
    %v336 = vmul.f32 %v322, %v335
    %v337 = vadd.f32 %v336, 0.014752088
    %v338 = vmul.f32 %v322, %v337
    %v339 = vadd.f32 %v338, 0.112945676
    %v340 = vmul.f32 %v322, %v339
    %v341 = vadd.f32 %v340, 0.4994258
    %v342 = vmul.f32 %v322, %v341
    %v343 = vadd.f32 %v342, 1.0
    %v344 = vrcp.pop %v343
    %v345 = vmul.f32 %v343, %v344
    %v346 = vsub.f32 1.0, %v345
    %v347 = vmul.f32 %v344, %v346
    %v348 = vadd.f32 %v344, %v347
    %vm349 = vweird.f32 %v343
    %vm350 = vweird.f32 %v344
    %vm351 = vmor %vm349, %vm350
    %v352 = vsel %vm351, %v344, %v348
    %v353 = vand.u32 2147483647, %v343
    %vm354 = vcmp.eq.f32.partialorder %v353, 8.507059e+37
    %v355 = vand.u32 %v343, 2147483648
    %v356 = vor.u32 1.1754944e-38, %v355
    %v357 = vsel %vm354, %v356, %v352
    %v358 = vmul.f32 %v333, %v357
    %v359 = vmin.f32 %v358, 1.0
    %v360 = vmax.f32 %v359, -1.0
    %v361 = vmul.f32 %v189, %v189
    %v362 = vmin.f32 16.0, %v361
    %v363 = vmul.f32 %v362, 2.1237322e-06
    %v364 = vadd.f32 %v363, 0.00028619796
    %v365 = vmul.f32 %v362, %v364
    %v366 = vadd.f32 %v365, 0.0036580483
    %v367 = vmul.f32 %v362, %v366
    %v368 = vadd.f32 %v367, 0.05243302
    %v369 = vmul.f32 %v362, %v368
    %v370 = vadd.f32 %v369, 0.18741608
    %v371 = vmul.f32 %v362, %v370
    %v372 = vadd.f32 %v371, 1.1283791
    %v373 = vmul.f32 %v189, %v372
    %v374 = vmul.f32 %v362, 3.8918573e-05
    %v375 = vadd.f32 %v374, 0.001143296
    %v376 = vmul.f32 %v362, %v375
    %v377 = vadd.f32 %v376, 0.014752088
    %v378 = vmul.f32 %v362, %v377
    %v379 = vadd.f32 %v378, 0.112945676
    %v380 = vmul.f32 %v362, %v379
    %v381 = vadd.f32 %v380, 0.4994258
    %v382 = vmul.f32 %v362, %v381
    %v383 = vadd.f32 %v382, 1.0
    %v384 = vrcp.pop %v383
    %v385 = vmul.f32 %v383, %v384
    %v386 = vsub.f32 1.0, %v385
    %v387 = vmul.f32 %v384, %v386
    %v388 = vadd.f32 %v384, %v387
    %vm389 = vweird.f32 %v383
    %vm390 = vweird.f32 %v384
    %vm391 = vmor %vm389, %vm390
    %v392 = vsel %vm391, %v384, %v388
    %v393 = vand.u32 2147483647, %v383
    %vm394 = vcmp.eq.f32.partialorder %v393, 8.507059e+37
    %v395 = vand.u32 %v383, 2147483648
    %v396 = vor.u32 1.1754944e-38, %v395
    %v397 = vsel %vm394, %v396, %v392
    %v398 = vmul.f32 %v373, %v397
    %v399 = vmin.f32 %v398, 1.0
    %v400 = vmax.f32 %v399, -1.0
    %v401 = vmul.f32 %v190, %v190
    %v402 = vmin.f32 16.0, %v401
    %v403 = vmul.f32 %v402, 2.1237322e-06
    %v404 = vadd.f32 %v403, 0.00028619796
    %v405 = vmul.f32 %v402, %v404
    %v406 = vadd.f32 %v405, 0.0036580483
    %v407 = vmul.f32 %v402, %v406
    %v408 = vadd.f32 %v407, 0.05243302
    %v409 = vmul.f32 %v402, %v408
    %v410 = vadd.f32 %v409, 0.18741608
    %v411 = vmul.f32 %v402, %v410
    %v412 = vadd.f32 %v411, 1.1283791
    %v413 = vmul.f32 %v190, %v412
    %v414 = vmul.f32 %v402, 3.8918573e-05
    %v415 = vadd.f32 %v414, 0.001143296
    %v416 = vmul.f32 %v402, %v415
    %v417 = vadd.f32 %v416, 0.014752088
    %v418 = vmul.f32 %v402, %v417
    %v419 = vadd.f32 %v418, 0.112945676
    %v420 = vmul.f32 %v402, %v419
    %v421 = vadd.f32 %v420, 0.4994258
    %v422 = vmul.f32 %v402, %v421
    %v423 = vadd.f32 %v422, 1.0
    %v424 = vrcp.pop %v423
    %v425 = vmul.f32 %v423, %v424
    %v426 = vsub.f32 1.0, %v425
    %v427 = vmul.f32 %v424, %v426
    %v428 = vadd.f32 %v424, %v427
    %vm429 = vweird.f32 %v423
    %vm430 = vweird.f32 %v424
    %vm431 = vmor %vm429, %vm430
    %v432 = vsel %vm431, %v424, %v428
    %v433 = vand.u32 2147483647, %v423
    %vm434 = vcmp.eq.f32.partialorder %v433, 8.507059e+37
    %v435 = vand.u32 %v423, 2147483648
    %v436 = vor.u32 1.1754944e-38, %v435
    %v437 = vsel %vm434, %v436, %v432
    %v438 = vmul.f32 %v413, %v437
    %v439 = vmin.f32 %v438, 1.0
    %v440 = vmax.f32 %v439, -1.0
    %v441 = vmul.f32 %v191, %v191
    %v442 = vmin.f32 16.0, %v441
    %v443 = vmul.f32 %v442, 2.1237322e-06
    %v444 = vadd.f32 %v443, 0.00028619796
    %v445 = vmul.f32 %v442, %v444
    %v446 = vadd.f32 %v445, 0.0036580483
    %v447 = vmul.f32 %v442, %v446
    %v448 = vadd.f32 %v447, 0.05243302
    %v449 = vmul.f32 %v442, %v448
    %v450 = vadd.f32 %v449, 0.18741608
    %v451 = vmul.f32 %v442, %v450
    %v452 = vadd.f32 %v451, 1.1283791
    %v453 = vmul.f32 %v191, %v452
    %v454 = vmul.f32 %v442, 3.8918573e-05
    %v455 = vadd.f32 %v454, 0.001143296
    %v456 = vmul.f32 %v442, %v455
    %v457 = vadd.f32 %v456, 0.014752088
    %v458 = vmul.f32 %v442, %v457
    %v459 = vadd.f32 %v458, 0.112945676
    %v460 = vmul.f32 %v442, %v459
    %v461 = vadd.f32 %v460, 0.4994258
    %v462 = vmul.f32 %v442, %v461
    %v463 = vadd.f32 %v462, 1.0
    %v464 = vrcp.pop %v463
    %v465 = vmul.f32 %v463, %v464
    %v466 = vsub.f32 1.0, %v465
    %v467 = vmul.f32 %v464, %v466
    %v468 = vadd.f32 %v464, %v467
    %vm469 = vweird.f32 %v463
    %vm470 = vweird.f32 %v464
    %vm471 = vmor %vm469, %vm470
    %v472 = vsel %vm471, %v464, %v468
    %v473 = vand.u32 2147483647, %v463
    %vm474 = vcmp.eq.f32.partialorder %v473, 8.507059e+37
    %v475 = vand.u32 %v463, 2147483648
    %v476 = vor.u32 1.1754944e-38, %v475
    %v477 = vsel %vm474, %v476, %v472
    %v478 = vmul.f32 %v453, %v477
    %v479 = vmin.f32 %v478, 1.0
    %v480 = vmax.f32 %v479, -1.0
    %v481 = vmul.f32 %v192, %v192
    %v482 = vmin.f32 16.0, %v481
    %v483 = vmul.f32 %v482, 2.1237322e-06
    %v484 = vadd.f32 %v483, 0.00028619796
    %v485 = vmul.f32 %v482, %v484
    %v486 = vadd.f32 %v485, 0.0036580483
    %v487 = vmul.f32 %v482, %v486
    %v488 = vadd.f32 %v487, 0.05243302
    %v489 = vmul.f32 %v482, %v488
    %v490 = vadd.f32 %v489, 0.18741608
    %v491 = vmul.f32 %v482, %v490
    %v492 = vadd.f32 %v491, 1.1283791
    %v493 = vmul.f32 %v192, %v492
    %v494 = vmul.f32 %v482, 3.8918573e-05
    %v495 = vadd.f32 %v494, 0.001143296
    %v496 = vmul.f32 %v482, %v495
    %v497 = vadd.f32 %v496, 0.014752088
    %v498 = vmul.f32 %v482, %v497
    %v499 = vadd.f32 %v498, 0.112945676
    %v500 = vmul.f32 %v482, %v499
    %v501 = vadd.f32 %v500, 0.4994258
    %v502 = vmul.f32 %v482, %v501
    %v503 = vadd.f32 %v502, 1.0
    %v504 = vrcp.pop %v503
    %v505 = vmul.f32 %v503, %v504
    %v506 = vsub.f32 1.0, %v505
    %v507 = vmul.f32 %v504, %v506
    %v508 = vadd.f32 %v504, %v507
    %vm509 = vweird.f32 %v503
    %vm510 = vweird.f32 %v504
    %vm511 = vmor %vm509, %vm510
    %v512 = vsel %vm511, %v504, %v508
    %v513 = vand.u32 2147483647, %v503
    %vm514 = vcmp.eq.f32.partialorder %v513, 8.507059e+37
    %v515 = vand.u32 %v503, 2147483648
    %v516 = vor.u32 1.1754944e-38, %v515
    %v517 = vsel %vm514, %v516, %v512
    %v518 = vmul.f32 %v493, %v517
    %v519 = vmin.f32 %v518, 1.0
    %v520 = vmax.f32 %v519, -1.0
    %v521 = vmul.f32 %v193, %v193
    %v522 = vmin.f32 16.0, %v521
    %v523 = vmul.f32 %v522, 2.1237322e-06
    %v524 = vadd.f32 %v523, 0.00028619796
    %v525 = vmul.f32 %v522, %v524
    %v526 = vadd.f32 %v525, 0.0036580483
    %v527 = vmul.f32 %v522, %v526
    %v528 = vadd.f32 %v527, 0.05243302
    %v529 = vmul.f32 %v522, %v528
    %v530 = vadd.f32 %v529, 0.18741608
    %v531 = vmul.f32 %v522, %v530
    %v532 = vadd.f32 %v531, 1.1283791
    %v533 = vmul.f32 %v193, %v532
    %v534 = vmul.f32 %v522, 3.8918573e-05
    %v535 = vadd.f32 %v534, 0.001143296
    %v536 = vmul.f32 %v522, %v535
    %v537 = vadd.f32 %v536, 0.014752088
    %v538 = vmul.f32 %v522, %v537
    %v539 = vadd.f32 %v538, 0.112945676
    %v540 = vmul.f32 %v522, %v539
    %v541 = vadd.f32 %v540, 0.4994258
    %v542 = vmul.f32 %v522, %v541
    %v543 = vadd.f32 %v542, 1.0
    %v544 = vrcp.pop %v543
    %v545 = vmul.f32 %v543, %v544
    %v546 = vsub.f32 1.0, %v545
    %v547 = vmul.f32 %v544, %v546
    %v548 = vadd.f32 %v544, %v547
    %vm549 = vweird.f32 %v543
    %vm550 = vweird.f32 %v544
    %vm551 = vmor %vm549, %vm550
    %v552 = vsel %vm551, %v544, %v548
    %v553 = vand.u32 2147483647, %v543
    %vm554 = vcmp.eq.f32.partialorder %v553, 8.507059e+37
    %v555 = vand.u32 %v543, 2147483648
    %v556 = vor.u32 1.1754944e-38, %v555
    %v557 = vsel %vm554, %v556, %v552
    %v558 = vmul.f32 %v533, %v557
    %v559 = vmin.f32 %v558, 1.0
    %v560 = vmax.f32 %v559, -1.0
    %v561 = vmul.f32 %v194, %v194
    %v562 = vmin.f32 16.0, %v561
    %v563 = vmul.f32 %v562, 2.1237322e-06
    %v564 = vadd.f32 %v563, 0.00028619796
    %v565 = vmul.f32 %v562, %v564
    %v566 = vadd.f32 %v565, 0.0036580483
    %v567 = vmul.f32 %v562, %v566
    %v568 = vadd.f32 %v567, 0.05243302
    %v569 = vmul.f32 %v562, %v568
    %v570 = vadd.f32 %v569, 0.18741608
    %v571 = vmul.f32 %v562, %v570
    %v572 = vadd.f32 %v571, 1.1283791
    %v573 = vmul.f32 %v194, %v572
    %v574 = vmul.f32 %v562, 3.8918573e-05
    %v575 = vadd.f32 %v574, 0.001143296
    %v576 = vmul.f32 %v562, %v575
    %v577 = vadd.f32 %v576, 0.014752088
    %v578 = vmul.f32 %v562, %v577
    %v579 = vadd.f32 %v578, 0.112945676
    %v580 = vmul.f32 %v562, %v579
    %v581 = vadd.f32 %v580, 0.4994258
    %v582 = vmul.f32 %v562, %v581
    %v583 = vadd.f32 %v582, 1.0
    %v584 = vrcp.pop %v583
    %v585 = vmul.f32 %v583, %v584
    %v586 = vsub.f32 1.0, %v585
    %v587 = vmul.f32 %v584, %v586
    %v588 = vadd.f32 %v584, %v587
    %vm589 = vweird.f32 %v583
    %vm590 = vweird.f32 %v584
    %vm591 = vmor %vm589, %vm590
    %v592 = vsel %vm591, %v584, %v588
    %v593 = vand.u32 2147483647, %v583
    %vm594 = vcmp.eq.f32.partialorder %v593, 8.507059e+37
    %v595 = vand.u32 %v583, 2147483648
    %v596 = vor.u32 1.1754944e-38, %v595
    %v597 = vsel %vm594, %v596, %v592
    %v598 = vmul.f32 %v573, %v597
    %v599 = vmin.f32 %v598, 1.0
    %v600 = vmax.f32 %v599, -1.0
    %v601 = vmul.f32 %v195, %v195
    %v602 = vmin.f32 16.0, %v601
    %v603 = vmul.f32 %v602, 2.1237322e-06
    %v604 = vadd.f32 %v603, 0.00028619796
    %v605 = vmul.f32 %v602, %v604
    %v606 = vadd.f32 %v605, 0.0036580483
    %v607 = vmul.f32 %v602, %v606
    %v608 = vadd.f32 %v607, 0.05243302
    %v609 = vmul.f32 %v602, %v608
    %v610 = vadd.f32 %v609, 0.18741608
    %v611 = vmul.f32 %v602, %v610
    %v612 = vadd.f32 %v611, 1.1283791
    %v613 = vmul.f32 %v195, %v612
    %v614 = vmul.f32 %v602, 3.8918573e-05
    %v615 = vadd.f32 %v614, 0.001143296
    %v616 = vmul.f32 %v602, %v615
    %v617 = vadd.f32 %v616, 0.014752088
    %v618 = vmul.f32 %v602, %v617
    %v619 = vadd.f32 %v618, 0.112945676
    %v620 = vmul.f32 %v602, %v619
    %v621 = vadd.f32 %v620, 0.4994258
    %v622 = vmul.f32 %v602, %v621
    %v623 = vadd.f32 %v622, 1.0
    %v624 = vrcp.pop %v623
    %v625 = vmul.f32 %v623, %v624
    %v626 = vsub.f32 1.0, %v625
    %v627 = vmul.f32 %v624, %v626
    %v628 = vadd.f32 %v624, %v627
    %vm629 = vweird.f32 %v623
    %vm630 = vweird.f32 %v624
    %vm631 = vmor %vm629, %vm630
    %v632 = vsel %vm631, %v624, %v628
    %v633 = vand.u32 2147483647, %v623
    %vm634 = vcmp.eq.f32.partialorder %v633, 8.507059e+37
    %v635 = vand.u32 %v623, 2147483648
    %v636 = vor.u32 1.1754944e-38, %v635
    %v637 = vsel %vm634, %v636, %v632
    %v638 = vmul.f32 %v613, %v637
    %v639 = vmin.f32 %v638, 1.0
    %v640 = vmax.f32 %v639, -1.0
    %v641 = vmul.f32 %v196, %v196
    %v642 = vmin.f32 16.0, %v641
    %v643 = vmul.f32 %v642, 2.1237322e-06
    %v644 = vadd.f32 %v643, 0.00028619796
    %v645 = vmul.f32 %v642, %v644
    %v646 = vadd.f32 %v645, 0.0036580483
    %v647 = vmul.f32 %v642, %v646
    %v648 = vadd.f32 %v647, 0.05243302
    %v649 = vmul.f32 %v642, %v648
    %v650 = vadd.f32 %v649, 0.18741608
    %v651 = vmul.f32 %v642, %v650
    %v652 = vadd.f32 %v651, 1.1283791
    %v653 = vmul.f32 %v196, %v652
    %v654 = vmul.f32 %v642, 3.8918573e-05
    %v655 = vadd.f32 %v654, 0.001143296
    %v656 = vmul.f32 %v642, %v655
    %v657 = vadd.f32 %v656, 0.014752088
    %v658 = vmul.f32 %v642, %v657
    %v659 = vadd.f32 %v658, 0.112945676
    %v660 = vmul.f32 %v642, %v659
    %v661 = vadd.f32 %v660, 0.4994258
    %v662 = vmul.f32 %v642, %v661
    %v663 = vadd.f32 %v662, 1.0
    %v664 = vrcp.pop %v663
    %v665 = vmul.f32 %v663, %v664
    %v666 = vsub.f32 1.0, %v665
    %v667 = vmul.f32 %v664, %v666
    %v668 = vadd.f32 %v664, %v667
    %vm669 = vweird.f32 %v663
    %vm670 = vweird.f32 %v664
    %vm671 = vmor %vm669, %vm670
    %v672 = vsel %vm671, %v664, %v668
    %v673 = vand.u32 2147483647, %v663
    %vm674 = vcmp.eq.f32.partialorder %v673, 8.507059e+37
    %v675 = vand.u32 %v663, 2147483648
    %v676 = vor.u32 1.1754944e-38, %v675
    %v677 = vsel %vm674, %v676, %v672
    %v678 = vmul.f32 %v653, %v677
    %v679 = vmin.f32 %v678, 1.0
    %v680 = vmax.f32 %v679, -1.0
    %v681 = vmul.f32 %v197, %v197
    %v682 = vmin.f32 16.0, %v681
    %v683 = vmul.f32 %v682, 2.1237322e-06
    %v684 = vadd.f32 %v683, 0.00028619796
    %v685 = vmul.f32 %v682, %v684
    %v686 = vadd.f32 %v685, 0.0036580483
    %v687 = vmul.f32 %v682, %v686
    %v688 = vadd.f32 %v687, 0.05243302
    %v689 = vmul.f32 %v682, %v688
    %v690 = vadd.f32 %v689, 0.18741608
    %v691 = vmul.f32 %v682, %v690
    %v692 = vadd.f32 %v691, 1.1283791
    %v693 = vmul.f32 %v197, %v692
    %v694 = vmul.f32 %v682, 3.8918573e-05
    %v695 = vadd.f32 %v694, 0.001143296
    %v696 = vmul.f32 %v682, %v695
    %v697 = vadd.f32 %v696, 0.014752088
    %v698 = vmul.f32 %v682, %v697
    %v699 = vadd.f32 %v698, 0.112945676
    %v700 = vmul.f32 %v682, %v699
    %v701 = vadd.f32 %v700, 0.4994258
    %v702 = vmul.f32 %v682, %v701
    %v703 = vadd.f32 %v702, 1.0
    %v704 = vrcp.pop %v703
    %v705 = vmul.f32 %v703, %v704
    %v706 = vsub.f32 1.0, %v705
    %v707 = vmul.f32 %v704, %v706
    %v708 = vadd.f32 %v704, %v707
    %vm709 = vweird.f32 %v703
    %vm710 = vweird.f32 %v704
    %vm711 = vmor %vm709, %vm710
    %v712 = vsel %vm711, %v704, %v708
    %v713 = vand.u32 2147483647, %v703
    %vm714 = vcmp.eq.f32.partialorder %v713, 8.507059e+37
    %v715 = vand.u32 %v703, 2147483648
    %v716 = vor.u32 1.1754944e-38, %v715
    %v717 = vsel %vm714, %v716, %v712
    %v718 = vmul.f32 %v693, %v717
    %v719 = vmin.f32 %v718, 1.0
    %v720 = vmax.f32 %v719, -1.0
    %v721 = vmul.f32 %v198, %v198
    %v722 = vmin.f32 16.0, %v721
    %v723 = vmul.f32 %v722, 2.1237322e-06
    %v724 = vadd.f32 %v723, 0.00028619796
    %v725 = vmul.f32 %v722, %v724
    %v726 = vadd.f32 %v725, 0.0036580483
    %v727 = vmul.f32 %v722, %v726
    %v728 = vadd.f32 %v727, 0.05243302
    %v729 = vmul.f32 %v722, %v728
    %v730 = vadd.f32 %v729, 0.18741608
    %v731 = vmul.f32 %v722, %v730
    %v732 = vadd.f32 %v731, 1.1283791
    %v733 = vmul.f32 %v198, %v732
    %v734 = vmul.f32 %v722, 3.8918573e-05
    %v735 = vadd.f32 %v734, 0.001143296
    %v736 = vmul.f32 %v722, %v735
    %v737 = vadd.f32 %v736, 0.014752088
    %v738 = vmul.f32 %v722, %v737
    %v739 = vadd.f32 %v738, 0.112945676
    %v740 = vmul.f32 %v722, %v739
    %v741 = vadd.f32 %v740, 0.4994258
    %v742 = vmul.f32 %v722, %v741
    %v743 = vadd.f32 %v742, 1.0
    %v744 = vrcp.pop %v743
    %v745 = vmul.f32 %v743, %v744
    %v746 = vsub.f32 1.0, %v745
    %v747 = vmul.f32 %v744, %v746
    %v748 = vadd.f32 %v744, %v747
    %vm749 = vweird.f32 %v743
    %vm750 = vweird.f32 %v744
    %vm751 = vmor %vm749, %vm750
    %v752 = vsel %vm751, %v744, %v748
    %v753 = vand.u32 2147483647, %v743
    %vm754 = vcmp.eq.f32.partialorder %v753, 8.507059e+37
    %v755 = vand.u32 %v743, 2147483648
    %v756 = vor.u32 1.1754944e-38, %v755
    %v757 = vsel %vm754, %v756, %v752
    %v758 = vmul.f32 %v733, %v757
    %v759 = vmin.f32 %v758, 1.0
    %v760 = vmax.f32 %v759, -1.0
    %v761 = vmul.f32 %v199, %v199
    %v762 = vmin.f32 16.0, %v761
    %v763 = vmul.f32 %v762, 2.1237322e-06
    %v764 = vadd.f32 %v763, 0.00028619796
    %v765 = vmul.f32 %v762, %v764
    %v766 = vadd.f32 %v765, 0.0036580483
    %v767 = vmul.f32 %v762, %v766
    %v768 = vadd.f32 %v767, 0.05243302
    %v769 = vmul.f32 %v762, %v768
    %v770 = vadd.f32 %v769, 0.18741608
    %v771 = vmul.f32 %v762, %v770
    %v772 = vadd.f32 %v771, 1.1283791
    %v773 = vmul.f32 %v199, %v772
    %v774 = vmul.f32 %v762, 3.8918573e-05
    %v775 = vadd.f32 %v774, 0.001143296
    %v776 = vmul.f32 %v762, %v775
    %v777 = vadd.f32 %v776, 0.014752088
    %v778 = vmul.f32 %v762, %v777
    %v779 = vadd.f32 %v778, 0.112945676
    %v780 = vmul.f32 %v762, %v779
    %v781 = vadd.f32 %v780, 0.4994258
    %v782 = vmul.f32 %v762, %v781
    %v783 = vadd.f32 %v782, 1.0
    %v784 = vrcp.pop %v783
    %v785 = vmul.f32 %v783, %v784
    %v786 = vsub.f32 1.0, %v785
    %v787 = vmul.f32 %v784, %v786
    %v788 = vadd.f32 %v784, %v787
    %vm789 = vweird.f32 %v783
    %vm790 = vweird.f32 %v784
    %vm791 = vmor %vm789, %vm790
    %v792 = vsel %vm791, %v784, %v788
    %v793 = vand.u32 2147483647, %v783
    %vm794 = vcmp.eq.f32.partialorder %v793, 8.507059e+37
    %v795 = vand.u32 %v783, 2147483648
    %v796 = vor.u32 1.1754944e-38, %v795
    %v797 = vsel %vm794, %v796, %v792
    %v798 = vmul.f32 %v773, %v797
    %v799 = vmin.f32 %v798, 1.0
    %v800 = vmax.f32 %v799, -1.0
    %v801 = vmul.f32 %v200, %v200
    %v802 = vmin.f32 16.0, %v801
    %v803 = vmul.f32 %v802, 2.1237322e-06
    %v804 = vadd.f32 %v803, 0.00028619796
    %v805 = vmul.f32 %v802, %v804
    %v806 = vadd.f32 %v805, 0.0036580483
    %v807 = vmul.f32 %v802, %v806
    %v808 = vadd.f32 %v807, 0.05243302
    %v809 = vmul.f32 %v802, %v808
    %v810 = vadd.f32 %v809, 0.18741608
    %v811 = vmul.f32 %v802, %v810
    %v812 = vadd.f32 %v811, 1.1283791
    %v813 = vmul.f32 %v200, %v812
    %v814 = vmul.f32 %v802, 3.8918573e-05
    %v815 = vadd.f32 %v814, 0.001143296
    %v816 = vmul.f32 %v802, %v815
    %v817 = vadd.f32 %v816, 0.014752088
    %v818 = vmul.f32 %v802, %v817
    %v819 = vadd.f32 %v818, 0.112945676
    %v820 = vmul.f32 %v802, %v819
    %v821 = vadd.f32 %v820, 0.4994258
    %v822 = vmul.f32 %v802, %v821
    %v823 = vadd.f32 %v822, 1.0
    %v824 = vrcp.pop %v823
    %v825 = vmul.f32 %v823, %v824
    %v826 = vsub.f32 1.0, %v825
    %v827 = vmul.f32 %v824, %v826
    %v828 = vadd.f32 %v824, %v827
    %vm829 = vweird.f32 %v823
    %vm830 = vweird.f32 %v824
    %vm831 = vmor %vm829, %vm830
    %v832 = vsel %vm831, %v824, %v828
    %v833 = vand.u32 2147483647, %v823
    %vm834 = vcmp.eq.f32.partialorder %v833, 8.507059e+37
    %v835 = vand.u32 %v823, 2147483648
    %v836 = vor.u32 1.1754944e-38, %v835
    %v837 = vsel %vm834, %v836, %v832
    %v838 = vmul.f32 %v813, %v837
    %v839 = vmin.f32 %v838, 1.0
    %v840 = vmax.f32 %v839, -1.0
    %v841 = vadd.f32 %v240, 1.0
    %v842 = vadd.f32 %v280, 1.0
    %v843 = vadd.f32 %v320, 1.0
    %v844 = vadd.f32 %v360, 1.0
    %v845 = vadd.f32 %v400, 1.0
    %v846 = vadd.f32 %v440, 1.0
    %v847 = vadd.f32 %v480, 1.0
    %v848 = vadd.f32 %v520, 1.0
    %v849 = vadd.f32 %v560, 1.0
    %v850 = vadd.f32 %v600, 1.0
    %v851 = vadd.f32 %v640, 1.0
    %v852 = vadd.f32 %v680, 1.0
    %v853 = vadd.f32 %v720, 1.0
    %v854 = vadd.f32 %v760, 1.0
    %v855 = vadd.f32 %v800, 1.0
    %v856 = vadd.f32 %v840, 1.0
    %v857 = vmul.f32 %v169, %v841
    %v858 = vmul.f32 %v170, %v842
    %v859 = vmul.f32 %v171, %v843
    %v860 = vmul.f32 %v172, %v844
    %v861 = vmul.f32 %v173, %v845
    %v862 = vmul.f32 %v174, %v846
    %v863 = vmul.f32 %v175, %v847
    %v864 = vmul.f32 %v176, %v848
    %v865 = vmul.f32 %v177, %v849
    %v866 = vmul.f32 %v178, %v850
    %v867 = vmul.f32 %v179, %v851
    %v868 = vmul.f32 %v180, %v852
    %v869 = vmul.f32 %v181, %v853
    %v870 = vmul.f32 %v182, %v854
    %v871 = vmul.f32 %v183, %v855
    %v872 = vmul.f32 %v184, %v856
    %v873 = vld [vmem:[#allocation7] sm:$0xff]
    %v874 = vld [vmem:[#allocation7 + $0x8] sm:$0xff]
    %v875 = vld [vmem:[#allocation7 + $0x10] sm:$0xff]
    %v876 = vld [vmem:[#allocation7 + $0x18] sm:$0xff]
    %v877 = vld [vmem:[#allocation7 + $0x20] sm:$0xff]
    %v878 = vld [vmem:[#allocation7 + $0x28] sm:$0xff]
    %v879 = vld [vmem:[#allocation7 + $0x30] sm:$0xff]
    %v880 = vld [vmem:[#allocation7 + $0x38] sm:$0xff]
    %v881 = vld [vmem:[#allocation7 + $0x40] sm:$0xff]
    %v882 = vld [vmem:[#allocation7 + $0x48] sm:$0xff]
    %v883 = vld [vmem:[#allocation7 + $0x50] sm:$0xff]
    %v884 = vld [vmem:[#allocation7 + $0x58] sm:$0xff]
    %v885 = vld [vmem:[#allocation7 + $0x60] sm:$0xff]
    %v886 = vld [vmem:[#allocation7 + $0x68] sm:$0xff]
    %v887 = vld [vmem:[#allocation7 + $0x70] sm:$0xff]
    %v888 = vld [vmem:[#allocation7 + $0x78] sm:$0xff]
    %v889 = vld [vmem:[%s4] sm:$0x1]
    %v891 = vperm.slane %v889, 0
    %893 = vmatpush.msra.mxu0 %v888
    %894 = vmatpush.msra.mxu0 %v887
    %895 = vmatpush.msra.mxu0 %v886
    %896 = vmatpush.msra.mxu0 %v885
    %897 = vmatpush.msra.mxu0 %v884
    %898 = vmatpush.msra.mxu0 %v883
    %899 = vmatpush.msra.mxu0 %v882
    %900 = vmatpush.msra.mxu0 %v881
    %901 = vmatpush.msra.mxu0 %v880
    %902 = vmatpush.msra.mxu0 %v879
    %903 = vmatpush.msra.mxu0 %v878
    %904 = vmatpush.msra.mxu0 %v877
    %905 = vmatpush.msra.mxu0 %v876
    %906 = vmatpush.msra.mxu0 %v875
    %907 = vmatpush.msra.mxu0 %v874
    %908 = vmatpush.msra.mxu0 %v873
    %909 = vmatmul.f32.gmra.mxu0 %v857
    %v910 = vpop.f32.mrf.mxu0
    %v911 = vadd.f32 %v891, %v910
    %912 = vmatmul.f32.gmra.mxu0 %v858
    %v913 = vpop.f32.mrf.mxu0
    %v914 = vadd.f32 %v891, %v913
    %915 = vmatmul.f32.gmra.mxu0 %v859
    %v916 = vpop.f32.mrf.mxu0
    %v917 = vadd.f32 %v891, %v916
    %918 = vmatmul.f32.gmra.mxu0 %v860
    %v919 = vpop.f32.mrf.mxu0
    %v920 = vadd.f32 %v891, %v919
    %921 = vmatmul.f32.gmra.mxu0 %v861
    %v922 = vpop.f32.mrf.mxu0
    %v923 = vadd.f32 %v891, %v922
    %924 = vmatmul.f32.gmra.mxu0 %v862
    %v925 = vpop.f32.mrf.mxu0
    %v926 = vadd.f32 %v891, %v925
    %927 = vmatmul.f32.gmra.mxu0 %v863
    %v928 = vpop.f32.mrf.mxu0
    %v929 = vadd.f32 %v891, %v928
    %930 = vmatmul.f32.gmra.mxu0 %v864
    %v931 = vpop.f32.mrf.mxu0
    %v932 = vadd.f32 %v891, %v931
    %933 = vmatmul.f32.gmra.mxu0 %v865
    %v934 = vpop.f32.mrf.mxu0
    %v935 = vadd.f32 %v891, %v934
    %936 = vmatmul.f32.gmra.mxu0 %v866
    %v937 = vpop.f32.mrf.mxu0
    %v938 = vadd.f32 %v891, %v937
    %939 = vmatmul.f32.gmra.mxu0 %v867
    %v940 = vpop.f32.mrf.mxu0
    %v941 = vadd.f32 %v891, %v940
    %942 = vmatmul.f32.gmra.mxu0 %v868
    %v943 = vpop.f32.mrf.mxu0
    %v944 = vadd.f32 %v891, %v943
    %945 = vmatmul.f32.gmra.mxu0 %v869
    %v946 = vpop.f32.mrf.mxu0
    %v947 = vadd.f32 %v891, %v946
    %948 = vmatmul.f32.gmra.mxu0 %v870
    %v949 = vpop.f32.mrf.mxu0
    %v950 = vadd.f32 %v891, %v949
    %951 = vmatmul.f32.gmra.mxu0 %v871
    %v952 = vpop.f32.mrf.mxu0
    %v953 = vadd.f32 %v891, %v952
    %954 = vmatmul.f32.gmra.mxu0 %v872
    %v955 = vpop.f32.mrf.mxu0
    %v956 = vadd.f32 %v891, %v955
    %957 = vdwg.mxu0
    %958 = vst [vmem:[#allocation8] sm:$0xff] %v911
    %959 = vst [vmem:[#allocation8 + $0x8] sm:$0xff] %v914
    %960 = vst [vmem:[#allocation8 + $0x10] sm:$0xff] %v917
    %961 = vst [vmem:[#allocation8 + $0x18] sm:$0xff] %v920
    %962 = vst [vmem:[#allocation8 + $0x20] sm:$0xff] %v923
    %963 = vst [vmem:[#allocation8 + $0x28] sm:$0xff] %v926
    %964 = vst [vmem:[#allocation8 + $0x30] sm:$0xff] %v929
    %965 = vst [vmem:[#allocation8 + $0x38] sm:$0xff] %v932
    %966 = vst [vmem:[#allocation8 + $0x40] sm:$0xff] %v935
    %967 = vst [vmem:[#allocation8 + $0x48] sm:$0xff] %v938
    %968 = vst [vmem:[#allocation8 + $0x50] sm:$0xff] %v941
    %969 = vst [vmem:[#allocation8 + $0x58] sm:$0xff] %v944
    %970 = vst [vmem:[#allocation8 + $0x60] sm:$0xff] %v947
    %971 = vst [vmem:[#allocation8 + $0x68] sm:$0xff] %v950
    %972 = vst [vmem:[#allocation8 + $0x70] sm:$0xff] %v953
    %973 = vst [vmem:[#allocation8 + $0x78] sm:$0xff] %v956
    // Predicated region
    $region34: #{tpu_custom_call.1} parent=1 // pred_check
      _
    $region35: #{tpu_custom_call.1} parent=1 // pred_check_branch
      %975 = sbr.rel (0) target = $region37
    $region36: #{tpu_custom_call.1} parent=1 // pred_region
      %977 = vsyncadd [#allocation4], 0
      %s978 = sshll.u32 [#allocation8], 4
      %s979 = int_to_ptr.vmem [resolvable:$true] %s978
      %s980 = sshll.u32 %s5, 4
      %s981 = int_to_ptr.hbm [resolvable:$true] %s980
      %986 = dma.vmem_to_hbm [thread:$0]  %s979, 2048, %s981, [#allocation4], 128, 128, 8
    $region37: #{tpu_custom_call.1} parent=1 // pred_fallthru
      _
    // Predicated region
    $region38: #{tpu_custom_call.1} parent=1 // pred_check
      _
    $region39: #{tpu_custom_call.1} parent=1 // pred_check_branch
      %988 = sbr.rel (0) target = $region41
    $region40: #{tpu_custom_call.1} parent=1 // pred_region
      %990 = dma.done [#allocation4], 2048
    $region41: #{tpu_custom_call.1} parent=1 // pred_fallthru
      _
    %991 = vsyncpa [#allocation3], 1
    %992 = vsyncpa [#allocation6], 1
    %993 = vsyncpa [#allocation4], 1

</llo_original>
